<compile_context>
chip_gen: v5e
topology: v5e:2x2
jax: 0.10.0
libtpu: 0.0.40
codegen_flags: <defaults>
</compile_context>

<pallas_src>
import math

import jax
import jax.numpy as jnp
from jax.experimental import pallas as pl
from jax.experimental.pallas import tpu as pltpu


def _sigmoid(a):
    # exp lowers to the EUP (separate bundle slot from the VPU gate math).
    return 1.0 / (1.0 + jnp.exp(-a))


def _gru_kernel(x_ref, wx_ref, wh_ref, bx_ref, bh_ref, out_ref, h_ref):
    """One (batch, hw-tile, timestep) grid point of the recurrent ConvGRU.

    Channel-major, spatial-last (lane-dense) layout:
      x_ref  : (1, 1, Cin, TILE)   current timestep's input pixels
      wx_ref : (3*Cp, Cin)         fused [update | reset | input] x-projection
      wh_ref : (3*Cp, Cp)          fused [update | reset | hidden] h-projection
      bx_ref : (3*Cp, 1)           fused x-side biases  [b_u | b_r | b_i]
      bh_ref : (3*Cp, 1)           fused h-side biases  [ 0  |  0  | b_h]
      out_ref: (1, 1, Cp, TILE)
      h_ref  : (Cp, TILE) f32 VMEM scratch carried across the T grid axis
    """
    t = pl.program_id(2)

    @pl.when(t == 0)
    def _init():
        h_ref[...] = jnp.zeros_like(h_ref)

    cp = h_ref.shape[0]
    x = x_ref[0, 0].astype(jnp.float32)          # (Cin, TILE)
    h = h_ref[...]                               # (Cp, TILE) f32

    # Two fused MXU calls per timestep (instead of six narrow ones).
    gx = jnp.dot(wx_ref[...], x, preferred_element_type=jnp.float32) + bx_ref[...]
    gh = jnp.dot(wh_ref[...], h, preferred_element_type=jnp.float32) + bh_ref[...]

    z = _sigmoid(gx[0:cp, :] + gh[0:cp, :])                       # update gate
    r = _sigmoid(gx[cp:2 * cp, :] + gh[cp:2 * cp, :])             # reset gate
    # NOTE: this cell applies the reset gate to conv_for_hidden(h) *including*
    # its bias, and uses ReLU (not tanh) for the candidate.
    mc = jnp.maximum(gx[2 * cp:, :] + r * gh[2 * cp:, :], 0.0)

    h_new = z * h + (1.0 - z) * mc
    h_ref[...] = h_new
    out_ref[0, 0] = h_new.astype(out_ref.dtype)


def _pick_tile(hw, max_tile=512):
    """Largest multiple-of-128 divisor of HW that is <= max_tile (else full HW)."""
    if hw % 128 != 0:
        return hw
    tile = min((max_tile // 128) * 128, hw)
    while hw % tile != 0:
        tile -= 128
    return max(tile, 128)


def _vmem_limit_bytes(cin, cp, tile):
    f32 = 4
    per_step = f32 * tile * (2 * cin       # double-buffered x_t block
                             + 2 * cp      # double-buffered out block
                             + cp          # hidden-state scratch
                             + 6 * cp      # gx / gh pre-activations
                             + 3 * cp)     # gate temporaries
    weights = f32 * (3 * cp * (cin + cp + 2))
    est = per_step + weights
    # Stay <= 64 MiB so the same setting is safe on v7x (64 MiB physical VMEM).
    return int(min(max(2 * est, 32 * 1024 * 1024), 64 * 1024 * 1024))


def conv_rnn_gru_forward(x, params, *, timesteps, batch_size, max_tile=512,
                         interpret=False):
    """ConvRnn(cell='Gru', recurrent mode) forward.

    x: (timesteps * batch_size, Cin, H, W)  ->  (timesteps * batch_size, Cout, H, W)
    """
    tb, cin, hgt, wid = x.shape
    assert tb == timesteps * batch_size, "leading dim must be TIMESTEPS*BATCH"
    hw = hgt * wid

    w_u, b_u = params["w_update"], params["b_update"]   # (Cout, Cin+Cout), (Cout,)
    w_r, b_r = params["w_reset"], params["b_reset"]
    w_i, b_i = params["w_input"], params["b_input"]     # (Cout, Cin)
    w_h, b_h = params["w_hidden"], params["b_hidden"]   # (Cout, Cout)
    cout = w_i.shape[0]
    cp = ((cout + 7) // 8) * 8                           # pad to sublane multiple

    f32 = jnp.float32

    def pad_rows(w):                                     # (Cout, k) -> (Cp, k)
        return jnp.pad(w.astype(f32), ((0, cp - cout), (0, 0)))

    def pad_vec(b):                                      # (Cout,) -> (Cp,)
        return jnp.pad(b.astype(f32), (0, cp - cout))

    # Split the concat-input convs into x / h halves, fuse the three
    # projections per source (done once, wrapper side).
    wux, wuh = w_u[:, :cin], w_u[:, cin:]
    wrx, wrh = w_r[:, :cin], w_r[:, cin:]
    wx = jnp.concatenate([pad_rows(wux), pad_rows(wrx), pad_rows(w_i)], axis=0)
    wh = jnp.concatenate(
        [jnp.pad(m.astype(f32), ((0, cp - cout), (0, cp - cout)))
         for m in (wuh, wrh, w_h)], axis=0)
    bx = jnp.concatenate([pad_vec(b_u), pad_vec(b_r), pad_vec(b_i)])[:, None]
    bh = jnp.concatenate([jnp.zeros((2 * cp,), f32), pad_vec(b_h)])[:, None]

    tile = _pick_tile(hw, max_tile)
    n_tiles = hw // tile

    # Pure reshape (no transpose): NCHW is already channel-major, spatial-last.
    x_tbc = x.reshape(timesteps, batch_size, cin, hw)

    grid = (batch_size, n_tiles, timesteps)

    out = pl.pallas_call(
        _gru_kernel,
        out_shape=jax.ShapeDtypeStruct((timesteps, batch_size, cp, hw), x.dtype),
        grid_spec=pltpu.PrefetchScalarGridSpec(
            num_scalar_prefetch=0,
            grid=grid,
            in_specs=[
                pl.BlockSpec((1, 1, cin, tile), lambda b, p, t: (t, b, 0, p)),
                # Constant index maps -> weights/biases DMA'd once, VMEM-resident.
                pl.BlockSpec((3 * cp, cin), lambda b, p, t: (0, 0)),
                pl.BlockSpec((3 * cp, cp), lambda b, p, t: (0, 0)),
                pl.BlockSpec((3 * cp, 1), lambda b, p, t: (0, 0)),
                pl.BlockSpec((3 * cp, 1), lambda b, p, t: (0, 0)),
            ],
            out_specs=pl.BlockSpec((1, 1, cp, tile), lambda b, p, t: (t, b, 0, p)),
            scratch_shapes=[pltpu.VMEM((cp, tile), jnp.float32)],
        ),
        compiler_params=pltpu.CompilerParams(
            dimension_semantics=("parallel", "parallel", "arbitrary"),
            vmem_limit_bytes=_vmem_limit_bytes(cin, cp, tile),
        ),
        interpret=interpret,
    )(x_tbc, wx, wh, bx, bh)

    out = out[:, :, :cout, :]
    return out.reshape(timesteps * batch_size, cout, hgt, wid)


# ----------------------------------------------------------------------------
# Pure-JAX reference mirroring the PyTorch module (for correctness check).
# ----------------------------------------------------------------------------
def conv_rnn_gru_reference(x, params, *, timesteps, batch_size):
    tb, cin, hgt, wid = x.shape
    cout = params["w_input"].shape[0]
    xs = x.reshape(timesteps, batch_size, cin, hgt, wid)
    h = jnp.zeros((batch_size, cout, hgt, wid), x.dtype)

    def conv1x1(w, b, v):
        return jnp.einsum("oc,bchw->bohw", w, v) + b[None, :, None, None]

    outs = []
    for t in range(timesteps):
        xt = xs[t]
        inp = jnp.concatenate([xt, h], axis=1)
        z = jax.nn.sigmoid(conv1x1(params["w_update"], params["b_update"], inp))
        r = jax.nn.sigmoid(conv1x1(params["w_reset"], params["b_reset"], inp))
        mi = conv1x1(params["w_input"], params["b_input"], xt)
        mh = conv1x1(params["w_hidden"], params["b_hidden"], h)
        mc = jnp.maximum(mi + r * mh, 0.0)
        h = z * h + (1.0 - z) * mc
        outs.append(h)
    return jnp.stack(outs, axis=0).reshape(timesteps * batch_size, cout, hgt, wid)


if __name__ == "__main__":
    # TODO(synk): only the configured (CELL_MODEL='Gru', MODE!='Standart') path is
    # implemented; the ConvRnnCell / 'Standart' branches are not exercised here.
    TIMESTEPS, BATCH, CIN, COUT, SIZE = 8, 2, 4, 32, 16

    key = jax.random.PRNGKey(0)
    ks = jax.random.split(key, 9)

    def uni(k, shape, fan_in):
        bound = 1.0 / math.sqrt(fan_in)
        return jax.random.uniform(k, shape, jnp.float32, minval=-bound, maxval=bound)

    x = jax.random.normal(ks[0], (TIMESTEPS * BATCH, CIN, SIZE, SIZE), jnp.float32)
    params = {
        "w_update": uni(ks[1], (COUT, CIN + COUT), CIN + COUT),
        "b_update": uni(ks[2], (COUT,), CIN + COUT),
        "w_reset":  uni(ks[3], (COUT, CIN + COUT), CIN + COUT),
        "b_reset":  uni(ks[4], (COUT,), CIN + COUT),
        "w_input":  uni(ks[5], (COUT, CIN), CIN),
        "b_input":  uni(ks[6], (COUT,), CIN),
        "w_hidden": uni(ks[7], (COUT, COUT), COUT),
        "b_hidden": uni(ks[8], (COUT,), COUT),
    }

    out = conv_rnn_gru_forward(x, params, timesteps=TIMESTEPS, batch_size=BATCH)
    out = jax.block_until_ready(out)

    ref = conv_rnn_gru_reference(x, params, timesteps=TIMESTEPS, batch_size=BATCH)
    if not jnp.allclose(out, ref, atol=1e-4, rtol=1e-4):
        err = float(jnp.max(jnp.abs(out - ref)))
        raise AssertionError(f"Pallas kernel mismatch vs reference: max abs err = {err}")

    print("KERNEL_OK")
</pallas_src>

<mosaic_0001>
module attributes {stable_mosaic.version = 11 : i64} {
  func.func @_gru_kernel(%arg0: i32, %arg1: i32, %arg2: i32, %arg3: memref<1x1x4x256xf32, #tpu.memory_space<vmem>>, %arg4: memref<96x4xf32, #tpu.memory_space<vmem>>, %arg5: memref<96x32xf32, #tpu.memory_space<vmem>>, %arg6: memref<96x1xf32, #tpu.memory_space<vmem>>, %arg7: memref<96x1xf32, #tpu.memory_space<vmem>>, %arg8: memref<1x1x32x256xf32, #tpu.memory_space<vmem>>, %arg9: memref<32x256xf32, #tpu.memory_space<vmem>>) attributes {dimension_semantics = [#tpu.dimension_semantics<parallel>, #tpu.dimension_semantics<parallel>, #tpu.dimension_semantics<arbitrary>], iteration_bounds = array<i64: 2, 1, 8>, scalar_prefetch = 0 : i64, scratch_operands = 1 : i64, tpu.core_type = #tpu.core_type<tc>, window_params = [{transform_indices = @transform_0, window_bounds = array<i64: 1, 1, 4, 256>}, {pipeline_mode = #tpu.pipeline_mode<synchronous>, transform_indices = @transform_1, window_bounds = array<i64: 96, 4>}, {pipeline_mode = #tpu.pipeline_mode<synchronous>, transform_indices = @transform_2, window_bounds = array<i64: 96, 32>}, {pipeline_mode = #tpu.pipeline_mode<synchronous>, transform_indices = @transform_3, window_bounds = array<i64: 96, 1>}, {pipeline_mode = #tpu.pipeline_mode<synchronous>, transform_indices = @transform_4, window_bounds = array<i64: 96, 1>}, {transform_indices = @transform_5, window_bounds = array<i64: 1, 1, 32, 256>}]} {
    %c0_i32 = arith.constant 0 : i32
    %0 = arith.cmpi eq, %arg2, %c0_i32 : i32
    %1 = arith.extui %0 : i1 to i32
    %c0_i32_0 = arith.constant 0 : i32
    %2 = arith.cmpi ne, %1, %c0_i32_0 : i32
    scf.if %2 {
      %cst_29 = arith.constant 0.000000e+00 : f32
      %51 = vector.broadcast %cst_29 : f32 to vector<32x256xf32>
      %c0_30 = arith.constant 0 : index
      %c0_31 = arith.constant 0 : index
      %52 = vector.load %arg9[%c0_30, %c0_31] : memref<32x256xf32, #tpu.memory_space<vmem>>, vector<32x256xf32>
      tpu.vector_store %arg9[%c0_30, %c0_31], %51 {strides = array<i32>} : memref<32x256xf32, #tpu.memory_space<vmem>>, vector<32x256xf32>,
    } else {
    }
    %c0 = arith.constant 0 : index
    %c0_1 = arith.constant 0 : index
    %c0_2 = arith.constant 0 : index
    %c0_3 = arith.constant 0 : index
    %3 = vector.load %arg3[%c0, %c0_1, %c0_2, %c0_3] : memref<1x1x4x256xf32, #tpu.memory_space<vmem>>, vector<1x1x4x256xf32>
    %4 = vector.shape_cast %3 : vector<1x1x4x256xf32> to vector<4x256xf32>
    %c0_4 = arith.constant 0 : index
    %c0_5 = arith.constant 0 : index
    %5 = vector.load %arg9[%c0_4, %c0_5] : memref<32x256xf32, #tpu.memory_space<vmem>>, vector<32x256xf32>
    %c0_6 = arith.constant 0 : index
    %c0_7 = arith.constant 0 : index
    %6 = vector.load %arg4[%c0_6, %c0_7] : memref<96x4xf32, #tpu.memory_space<vmem>>, vector<96x4xf32>
    %cst = arith.constant dense<0.000000e+00> : vector<96x256xf32>
    %7 = tpu.matmul %6, %4, %cst {dimension_numbers = #tpu.dot_dimension_numbers<[1], [0], [0], [1], [0, 0, 1, 1], [], []>} : vector<96x4xf32>, vector<4x256xf32>, vector<96x256xf32> -> vector<96x256xf32>
    %c0_8 = arith.constant 0 : index
    %c0_9 = arith.constant 0 : index
    %8 = vector.load %arg6[%c0_8, %c0_9] : memref<96x1xf32, #tpu.memory_space<vmem>>, vector<96x1xf32>
    %9 = vector.broadcast %8 : vector<96x1xf32> to vector<96x256xf32>
    %10 = arith.addf %7, %9 : vector<96x256xf32>
    %c0_10 = arith.constant 0 : index
    %c0_11 = arith.constant 0 : index
    %11 = vector.load %arg5[%c0_10, %c0_11] : memref<96x32xf32, #tpu.memory_space<vmem>>, vector<96x32xf32>
    %cst_12 = arith.constant dense<0.000000e+00> : vector<96x256xf32>
    %12 = tpu.matmul %11, %5, %cst_12 {dimension_numbers = #tpu.dot_dimension_numbers<[1], [0], [0], [1], [0, 0, 1, 1], [], []>} : vector<96x32xf32>, vector<32x256xf32>, vector<96x256xf32> -> vector<96x256xf32>
    %c0_13 = arith.constant 0 : index
    %c0_14 = arith.constant 0 : index
    %13 = vector.load %arg7[%c0_13, %c0_14] : memref<96x1xf32, #tpu.memory_space<vmem>>, vector<96x1xf32>
    %14 = vector.broadcast %13 : vector<96x1xf32> to vector<96x256xf32>
    %15 = arith.addf %12, %14 : vector<96x256xf32>
    %16 = vector.extract_strided_slice %10 {offsets = [0, 0], sizes = [32, 256], strides = [1, 1]} : vector<96x256xf32> to vector<32x256xf32>
    %17 = vector.extract_strided_slice %15 {offsets = [0, 0], sizes = [32, 256], strides = [1, 1]} : vector<96x256xf32> to vector<32x256xf32>
    %18 = arith.addf %16, %17 : vector<32x256xf32>
    %cst_15 = arith.constant 0.000000e+00 : f32
    %19 = vector.broadcast %cst_15 : f32 to vector<32x256xf32>
    %20 = arith.subf %19, %18 : vector<32x256xf32>
    %21 = math.exp %20 : vector<32x256xf32>
    %cst_16 = arith.constant 1.000000e+00 : f32
    %22 = vector.broadcast %cst_16 : f32 to vector<32x256xf32>
    %23 = arith.addf %22, %21 : vector<32x256xf32>
    %cst_17 = arith.constant 1.000000e+00 : f32
    %24 = vector.broadcast %cst_17 : f32 to vector<32x256xf32>
    %25 = arith.divf %24, %23 : vector<32x256xf32>
    %26 = vector.extract_strided_slice %10 {offsets = [32, 0], sizes = [32, 256], strides = [1, 1]} : vector<96x256xf32> to vector<32x256xf32>
    %27 = vector.extract_strided_slice %15 {offsets = [32, 0], sizes = [32, 256], strides = [1, 1]} : vector<96x256xf32> to vector<32x256xf32>
    %28 = arith.addf %26, %27 : vector<32x256xf32>
    %cst_18 = arith.constant 0.000000e+00 : f32
    %29 = vector.broadcast %cst_18 : f32 to vector<32x256xf32>
    %30 = arith.subf %29, %28 : vector<32x256xf32>
    %31 = math.exp %30 : vector<32x256xf32>
    %cst_19 = arith.constant 1.000000e+00 : f32
    %32 = vector.broadcast %cst_19 : f32 to vector<32x256xf32>
    %33 = arith.addf %32, %31 : vector<32x256xf32>
    %cst_20 = arith.constant 1.000000e+00 : f32
    %34 = vector.broadcast %cst_20 : f32 to vector<32x256xf32>
    %35 = arith.divf %34, %33 : vector<32x256xf32>
    %36 = vector.extract_strided_slice %10 {offsets = [64, 0], sizes = [32, 256], strides = [1, 1]} : vector<96x256xf32> to vector<32x256xf32>
    %37 = vector.extract_strided_slice %15 {offsets = [64, 0], sizes = [32, 256], strides = [1, 1]} : vector<96x256xf32> to vector<32x256xf32>
    %38 = arith.mulf %35, %37 : vector<32x256xf32>
    %39 = arith.addf %36, %38 : vector<32x256xf32>
    %cst_21 = arith.constant 0.000000e+00 : f32
    %40 = vector.broadcast %cst_21 : f32 to vector<32x256xf32>
    %41 = arith.maximumf %39, %40 : vector<32x256xf32>
    %42 = arith.mulf %25, %5 : vector<32x256xf32>
    %cst_22 = arith.constant 1.000000e+00 : f32
    %43 = vector.broadcast %cst_22 : f32 to vector<32x256xf32>
    %44 = arith.subf %43, %25 : vector<32x256xf32>
    %45 = arith.mulf %44, %41 : vector<32x256xf32>
    %46 = arith.addf %42, %45 : vector<32x256xf32>
    %c0_23 = arith.constant 0 : index
    %c0_24 = arith.constant 0 : index
    %47 = vector.load %arg9[%c0_23, %c0_24] : memref<32x256xf32, #tpu.memory_space<vmem>>, vector<32x256xf32>
    tpu.vector_store %arg9[%c0_23, %c0_24], %46 {strides = array<i32>} : memref<32x256xf32, #tpu.memory_space<vmem>>, vector<32x256xf32>,
    %c0_25 = arith.constant 0 : index
    %c0_26 = arith.constant 0 : index
    %c0_27 = arith.constant 0 : index
    %c0_28 = arith.constant 0 : index
    %48 = vector.load %arg8[%c0_25, %c0_26, %c0_27, %c0_28] : memref<1x1x32x256xf32, #tpu.memory_space<vmem>>, vector<1x1x32x256xf32>
    %49 = vector.shape_cast %48 : vector<1x1x32x256xf32> to vector<32x256xf32>
    %50 = vector.shape_cast %46 : vector<32x256xf32> to vector<1x1x32x256xf32>
    tpu.vector_store %arg8[%c0_25, %c0_26, %c0_27, %c0_28], %50 {strides = array<i32>} : memref<1x1x32x256xf32, #tpu.memory_space<vmem>>, vector<1x1x32x256xf32>,
    return
  }
  func.func @transform_0(%arg0: i32, %arg1: i32, %arg2: i32) -> (i32, i32, i32, i32) {
    %c0_i32 = arith.constant 0 : i32
    %c0_i32_0 = arith.constant 0 : i32
    return %arg2, %arg0, %c0_i32, %arg1 : i32, i32, i32, i32
  }
  func.func @transform_1(%arg0: i32, %arg1: i32, %arg2: i32) -> (i32, i32) {
    %c0_i32 = arith.constant 0 : i32
    %c0_i32_0 = arith.constant 0 : i32
    %c0_i32_1 = arith.constant 0 : i32
    return %c0_i32, %c0_i32_0 : i32, i32
  }
  func.func @transform_2(%arg0: i32, %arg1: i32, %arg2: i32) -> (i32, i32) {
    %c0_i32 = arith.constant 0 : i32
    %c0_i32_0 = arith.constant 0 : i32
    %c0_i32_1 = arith.constant 0 : i32
    return %c0_i32, %c0_i32_0 : i32, i32
  }
  func.func @transform_3(%arg0: i32, %arg1: i32, %arg2: i32) -> (i32, i32) {
    %c0_i32 = arith.constant 0 : i32
    %c0_i32_0 = arith.constant 0 : i32
    %c0_i32_1 = arith.constant 0 : i32
    return %c0_i32, %c0_i32_0 : i32, i32
  }
  func.func @transform_4(%arg0: i32, %arg1: i32, %arg2: i32) -> (i32, i32) {
    %c0_i32 = arith.constant 0 : i32
    %c0_i32_0 = arith.constant 0 : i32
    %c0_i32_1 = arith.constant 0 : i32
    return %c0_i32, %c0_i32_0 : i32, i32
  }
  func.func @transform_5(%arg0: i32, %arg1: i32, %arg2: i32) -> (i32, i32, i32, i32) {
    %c0_i32 = arith.constant 0 : i32
    %c0_i32_0 = arith.constant 0 : i32
    return %arg2, %arg0, %c0_i32, %arg1 : i32, i32, i32, i32
  }
}

</mosaic_0001>

<llo_original>
// kernel: tpu_custom_call.1
$region0: #{tpu_custom_call.1}
  #allocation0 [shape = 'u32[]', space=smem, size = 0x4, offset = 0x4, fixed_abs, tag = 'smem constant byte address 0x4 - core index']
  #allocation1 [shape = 'u32[72,128]{1,0:T(1,128)}', space=vmem, size = 0x9000, scoped, tag = 'internal scratch']
  #allocation2 [shape = 'f32[32,256]{1,0:T(8,128)}', space=vmem, size = 0x8000, scoped, tag = 'scratch operand']
  %s0 = inlined_call_operand.vmem [shape: f32[8,2,4,256], index: 0, kind: input, shape index: {}]
  %s1 = inlined_call_operand.vmem [shape: f32[96,4], index: 1, kind: input, shape index: {}]
  %s2 = inlined_call_operand.vmem [shape: f32[96,32], index: 2, kind: input, shape index: {}]
  %s3 = inlined_call_operand.vmem [shape: f32[96,1], index: 3, kind: input, shape index: {}]
  %s4 = inlined_call_operand.vmem [shape: f32[96,1], index: 4, kind: input, shape index: {}]
  %s5 = inlined_call_operand.hbm [shape: f32[8,2,32,256], index: 5, kind: output, shape index: {}]
  %s6 = sld [smem:[#allocation0]]
  $region57: #{tpu_custom_call.1} parent=0
    _
  %s8 = ssub.s32 1, %s6
  %s9 = scalar_select 0, %s8, %s6
  $region1: #{tpu_custom_call.1} parent=0
    #allocation3 [shape = 'u8[65536]{0}', space=vmem, size = 0x10000, scoped, tag = 'output window, operand 0']
    #allocation4 [shape = 's32[2]{0}', space=sflag, size = 0x8, scoped, tag = 'scoped memory for tpu_custom_call.1']
    %10 = vsyncpa [#allocation4], 0
    %s11 = scalar_lea.sflag [#allocation4], 1
    %12 = vsyncpa %s11, 0
    loop: start=0, step=1, limit=18
    $region2: #{tpu_custom_call.1} parent=1 // loop_pre_header
      _
    $region3: #{tpu_custom_call.1} parent=1 // loop_header
      %s14 = sphi 0, %s18
      %p15 = scmp.ge.s32.totalorder %s14, 18
      %s21 = sphi 0, %s40
      %s22 = sphi 0, %s36
      %s23 = sphi 0, %s32
      %s24 = sphi 0, %s21
      %s25 = sphi 0, %s22
      %s26 = sphi 0, %s23
      %s27 = sphi 0, %s24
      %s28 = sphi 0, %s25
      %s29 = sphi 0, %s26
      %s47 = sphi 0, %s49
      %s50 = sphi 0, %s47
      %s51 = sphi 0, %s50
      %s67 = sphi 0, %s51
      %s71 = sphi 0, %s71
      %s73 = sphi 0, %s71
      %s74 = sphi 0, %s73
      %s88 = sphi 0, %s74
      %s92 = sphi 0, %s92
      %s94 = sphi 0, %s92
      %s95 = sphi 0, %s94
      %s109 = sphi 0, %s95
      %s113 = sphi 0, %s113
      %s115 = sphi 0, %s113
      %s116 = sphi 0, %s115
      %s130 = sphi 0, %s116
      %s134 = sphi 0, %s134
      %s136 = sphi 0, %s134
      %s137 = sphi 0, %s136
      %s151 = sphi 0, %s137
      %s161 = sphi 0, %s163
      %s164 = sphi 0, %s161
      %s165 = sphi 0, %s164
      %s181 = sphi 0, %s165
    $region4: #{tpu_custom_call.1} parent=1 // loop_header_branch
      %17 = sbr.rel (%p15) target = $region8
    $region5: #{tpu_custom_call.1} parent=1 // loop_body
      %s19 = ssub.s32 %s14, 1
      %s20 = ssub.s32 %s14, 2
      %s30 = sadd.s32 1, %s23
      %p31 = scmp.ge.s32.totalorder %s30, 8
      %s32 = scalar_select %p31, 0, %s30
      %s33 = sadd.s32 1, %s22
      %s34 = scalar_select %p31, %s33, %s22
      %p35 = scmp.ge.s32.totalorder %s34, 1
      %s36 = scalar_select %p35, 0, %s34
      %s37 = sadd.s32 1, %s21
      %s38 = scalar_select %p35, %s37, %s21
      %p39 = scmp.ge.s32.totalorder %s38, 2
      %s40 = scalar_select %p39, 0, %s38
      %s41 = ssub.s32 %s23, %s32
      %s42 = ssub.s32 %s21, %s40
      %s43 = sor.u32 %s41, %s42
      %s44 = ssub.s32 %s22, %s36
      %s45 = sor.u32 %s43, %s44
      %p46 = scmp.eq.s32.totalorder %s45, 0
      %s48 = sadd.s32 %s47, 1
      %s49 = scalar_select %p46, %s47, %s48
      %p52 = pneg %p46
      %p53 = scmp.eq.s32.totalorder %s14, 15
      %p54 = por %p52, %p53
      %p55 = scmp.ne.s32.totalorder %s47, %s50
      %p56 = scmp.eq.s32.totalorder %s14, 0
      %p57 = por %p55, %p56
      %p58 = scmp.ne.s32.totalorder %s47, %s50
      %p59 = scmp.eq.s32.totalorder %s19, 15
      %p60 = por %p58, %p59
      %p61 = scmp.ne.s32.totalorder %s50, %s51
      %p62 = scmp.eq.s32.totalorder %s19, 0
      %p63 = por %p61, %p62
      %p64 = scmp.ne.s32.totalorder %s50, %s51
      %p65 = scmp.eq.s32.totalorder %s20, 15
      %p66 = por %p64, %p65
      %p68 = scmp.ne.s32.totalorder %s51, %s67
      %p69 = scmp.eq.s32.totalorder %s20, 0
      %p70 = por %p68, %p69
      %s72 = sadd.s32 %s71, 1
      %p75 = scmp.eq.s32.totalorder %s14, 15
      %p76 = scmp.ne.s32.totalorder %s71, %s73
      %p77 = scmp.eq.s32.totalorder %s14, 0
      %p78 = por %p76, %p77
      %p79 = scmp.ne.s32.totalorder %s71, %s73
      %p80 = scmp.eq.s32.totalorder %s19, 15
      %p81 = por %p79, %p80
      %p82 = scmp.ne.s32.totalorder %s73, %s74
      %p83 = scmp.eq.s32.totalorder %s19, 0
      %p84 = por %p82, %p83
      %p85 = scmp.ne.s32.totalorder %s73, %s74
      %p86 = scmp.eq.s32.totalorder %s20, 15
      %p87 = por %p85, %p86
      %p89 = scmp.ne.s32.totalorder %s74, %s88
      %p90 = scmp.eq.s32.totalorder %s20, 0
      %p91 = por %p89, %p90
      %s93 = sadd.s32 %s92, 1
      %p96 = scmp.eq.s32.totalorder %s14, 15
      %p97 = scmp.ne.s32.totalorder %s92, %s94
      %p98 = scmp.eq.s32.totalorder %s14, 0
      %p99 = por %p97, %p98
      %p100 = scmp.ne.s32.totalorder %s92, %s94
      %p101 = scmp.eq.s32.totalorder %s19, 15
      %p102 = por %p100, %p101
      %p103 = scmp.ne.s32.totalorder %s94, %s95
      %p104 = scmp.eq.s32.totalorder %s19, 0
      %p105 = por %p103, %p104
      %p106 = scmp.ne.s32.totalorder %s94, %s95
      %p107 = scmp.eq.s32.totalorder %s20, 15
      %p108 = por %p106, %p107
      %p110 = scmp.ne.s32.totalorder %s95, %s109
      %p111 = scmp.eq.s32.totalorder %s20, 0
      %p112 = por %p110, %p111
      %s114 = sadd.s32 %s113, 1
      %p117 = scmp.eq.s32.totalorder %s14, 15
      %p118 = scmp.ne.s32.totalorder %s113, %s115
      %p119 = scmp.eq.s32.totalorder %s14, 0
      %p120 = por %p118, %p119
      %p121 = scmp.ne.s32.totalorder %s113, %s115
      %p122 = scmp.eq.s32.totalorder %s19, 15
      %p123 = por %p121, %p122
      %p124 = scmp.ne.s32.totalorder %s115, %s116
      %p125 = scmp.eq.s32.totalorder %s19, 0
      %p126 = por %p124, %p125
      %p127 = scmp.ne.s32.totalorder %s115, %s116
      %p128 = scmp.eq.s32.totalorder %s20, 15
      %p129 = por %p127, %p128
      %p131 = scmp.ne.s32.totalorder %s116, %s130
      %p132 = scmp.eq.s32.totalorder %s20, 0
      %p133 = por %p131, %p132
      %s135 = sadd.s32 %s134, 1
      %p138 = scmp.eq.s32.totalorder %s14, 15
      %p139 = scmp.ne.s32.totalorder %s134, %s136
      %p140 = scmp.eq.s32.totalorder %s14, 0
      %p141 = por %p139, %p140
      %p142 = scmp.ne.s32.totalorder %s134, %s136
      %p143 = scmp.eq.s32.totalorder %s19, 15
      %p144 = por %p142, %p143
      %p145 = scmp.ne.s32.totalorder %s136, %s137
      %p146 = scmp.eq.s32.totalorder %s19, 0
      %p147 = por %p145, %p146
      %p148 = scmp.ne.s32.totalorder %s136, %s137
      %p149 = scmp.eq.s32.totalorder %s20, 15
      %p150 = por %p148, %p149
      %p152 = scmp.ne.s32.totalorder %s137, %s151
      %p153 = scmp.eq.s32.totalorder %s20, 0
      %p154 = por %p152, %p153
      %s155 = ssub.s32 %s23, %s32
      %s156 = ssub.s32 %s21, %s40
      %s157 = sor.u32 %s155, %s156
      %s158 = ssub.s32 %s22, %s36
      %s159 = sor.u32 %s157, %s158
      %p160 = scmp.eq.s32.totalorder %s159, 0
      %s162 = sadd.s32 %s161, 1
      %s163 = scalar_select %p160, %s161, %s162
      %p166 = pneg %p160
      %p167 = scmp.eq.s32.totalorder %s14, 15
      %p168 = por %p166, %p167
      %p169 = scmp.ne.s32.totalorder %s161, %s164
      %p170 = scmp.eq.s32.totalorder %s14, 0
      %p171 = por %p169, %p170
      %p172 = scmp.ne.s32.totalorder %s161, %s164
      %p173 = scmp.eq.s32.totalorder %s19, 15
      %p174 = por %p172, %p173
      %p175 = scmp.ne.s32.totalorder %s164, %s165
      %p176 = scmp.eq.s32.totalorder %s19, 0
      %p177 = por %p175, %p176
      %p178 = scmp.ne.s32.totalorder %s164, %s165
      %p179 = scmp.eq.s32.totalorder %s20, 15
      %p180 = por %p178, %p179
      %p182 = scmp.ne.s32.totalorder %s165, %s181
      %p183 = scmp.eq.s32.totalorder %s20, 0
      %p184 = por %p182, %p183
      %p185 = scmp.le.s32.totalorder 1, %s14
      %p186 = scmp.lt.s32.totalorder %s14, 17
      %p187 = pnand %p185, %p186
      %p188 = pneg %p187
      // Predicated region
      $region9: #{tpu_custom_call.1} parent=5 // pred_check
        _
      $region10: #{tpu_custom_call.1} parent=5 // pred_check_branch
        %190 = sbr.rel (%p187) target = $region12
      $region11: #{tpu_custom_call.1} parent=5 // pred_region
        %s191 = ssub.s32 %s14, 1
        // Predicated region
        $region13: #{tpu_custom_call.1} parent=11 // pred_check
          %p192 = pneg %p84
        $region14: #{tpu_custom_call.1} parent=11 // pred_check_branch
          %194 = sbr.rel (%p192) target = $region16
        $region15: #{tpu_custom_call.1} parent=11 // pred_region
          _
        $region16: #{tpu_custom_call.1} parent=11 // pred_fallthru
          _
        // Predicated region
        $region17: #{tpu_custom_call.1} parent=11 // pred_check
          %p195 = pneg %p105
        $region18: #{tpu_custom_call.1} parent=11 // pred_check_branch
          %197 = sbr.rel (%p195) target = $region20
        $region19: #{tpu_custom_call.1} parent=11 // pred_region
          _
        $region20: #{tpu_custom_call.1} parent=11 // pred_fallthru
          _
        // Predicated region
        $region21: #{tpu_custom_call.1} parent=11 // pred_check
          %p198 = pneg %p126
        $region22: #{tpu_custom_call.1} parent=11 // pred_check_branch
          %200 = sbr.rel (%p198) target = $region24
        $region23: #{tpu_custom_call.1} parent=11 // pred_region
          _
        $region24: #{tpu_custom_call.1} parent=11 // pred_fallthru
          _
        // Predicated region
        $region25: #{tpu_custom_call.1} parent=11 // pred_check
          %p201 = pneg %p147
        $region26: #{tpu_custom_call.1} parent=11 // pred_check_branch
          %203 = sbr.rel (%p201) target = $region28
        $region27: #{tpu_custom_call.1} parent=11 // pred_region
          _
        $region28: #{tpu_custom_call.1} parent=11 // pred_fallthru
          _
      $region12: #{tpu_custom_call.1} parent=5 // pred_fallthru
        _
      %p204 = scmp.lt.s32.totalorder %s14, 16
      // Predicated region
      $region29: #{tpu_custom_call.1} parent=5 // pred_check
        %p205 = pneg %p204
      $region30: #{tpu_custom_call.1} parent=5 // pred_check_branch
        %207 = sbr.rel (%p205) target = $region32
      $region31: #{tpu_custom_call.1} parent=5 // pred_region
        // Predicated region
        $region33: #{tpu_custom_call.1} parent=31 // pred_check
          %p208 = pneg %p57
        $region34: #{tpu_custom_call.1} parent=31 // pred_check_branch
          %210 = sbr.rel (%p208) target = $region36
        $region35: #{tpu_custom_call.1} parent=31 // pred_region
          %s211 = smul.u32 2, %s22
          %p212 = scmp.lt.s32.totalorder %s23, 7
          %s213 = scalar_select %p212, %s23, 7
          %p214 = scmp.lt.s32.totalorder %s21, 1
          %s215 = scalar_select %p214, %s21, 1
          %p216 = scmp.lt.s32.totalorder %s211, 1
          %s217 = scalar_select %p216, %s211, 1
          %s218 = smul.addr %s215, 2
          %s219 = sadd.s32 %s217, %s218
          %s220 = smul.addr %s213, 4
          %s221 = sadd.s32 %s219, %s220
          %s222 = smul.addr %s221, 4
          %s223 = scalar_lea.vmem %s0, %s222
          %s224 = smul.u32 2, %s22
        $region36: #{tpu_custom_call.1} parent=31 // pred_fallthru
          _
      $region32: #{tpu_custom_call.1} parent=5 // pred_fallthru
        _
      %p225 = scmp.le.s32.totalorder 1, %s14
      %p226 = scmp.lt.s32.totalorder %s14, 17
      %p227 = pnand %p225, %p226
      %p228 = pneg %p227
      // Predicated region
      $region37: #{tpu_custom_call.1} parent=5 // pred_check
        _
      $region38: #{tpu_custom_call.1} parent=5 // pred_check_branch
        %230 = sbr.rel (%p227) target = $region40
      $region39: #{tpu_custom_call.1} parent=5 // pred_region
        %s231 = ssub.s32 %s14, 1
        %s232 = smul.u32 2, %s25
        %p233 = scmp.lt.s32.totalorder %s26, 7
        %s234 = scalar_select %p233, %s26, 7
        %p235 = scmp.lt.s32.totalorder %s24, 1
        %s236 = scalar_select %p235, %s24, 1
        %p237 = scmp.lt.s32.totalorder %s232, 1
        %s238 = scalar_select %p237, %s232, 1
        %s239 = smul.addr %s236, 2
        %s240 = sadd.s32 %s238, %s239
        %s241 = smul.addr %s234, 4
        %s242 = sadd.s32 %s240, %s241
        %s243 = smul.addr %s242, 4
        %s244 = scalar_lea.vmem %s0, %s243
        %p245 = pneg %p63
        %p246 = pneg %p60
        %p247 = pneg %p84
        %p248 = pneg %p81
        %p249 = pneg %p105
        %p250 = pneg %p102
        %p251 = pneg %p126
        %p252 = pneg %p123
        %p253 = pneg %p147
        %p254 = pneg %p144
        %p255 = pneg %p177
        %p256 = pneg %p174
        %s257 = sand.u32 %s164, 1
        %s258 = scalar_lea.sflag [#allocation4], %s257
        %s259 = sand.u32 %s164, 1
        %s260 = smul.addr %s259, 64
        %s261 = scalar_lea.vmem [#allocation3], %s260
        %s262 = smul.u32 2, %s25
        %p263 = scmp.lt.s32.totalorder %s26, 7
        %s264 = scalar_select %p263, %s26, 7
        %p265 = scmp.lt.s32.totalorder %s24, 1
        %s266 = scalar_select %p265, %s24, 1
        %p267 = scmp.lt.s32.totalorder %s262, 1
        %s268 = scalar_select %p267, %s262, 1
        %s269 = smul.addr %s266, 2
        %s270 = sadd.s32 %s268, %s269
        %s271 = smul.addr %s264, 4
        %s272 = sadd.s32 %s270, %s271
        %s273 = smul.addr %s272, 4
        %s274 = scalar_lea.vmem %s0, %s273
        %s275 = smul.u32 2, %s25
        %s276 = smul.u32 2, %s25
        %p277 = scmp.eq.s32.totalorder %s26, 0
        // Predicated region
        $region41: #{tpu_custom_call.1} parent=39 // pred_check
          %p278 = pneg %p277
        $region42: #{tpu_custom_call.1} parent=39 // pred_check_branch
          %280 = sbr.rel (%p278) target = $region44
        $region43: #{tpu_custom_call.1} parent=39 // pred_region
          %281 = vst [vmem:[#allocation2] sm:$0xff] 0.0
          %282 = vst [vmem:[#allocation2 + $0x8] sm:$0xff] 0.0
          %283 = vst [vmem:[#allocation2 + $0x10] sm:$0xff] 0.0
          %284 = vst [vmem:[#allocation2 + $0x18] sm:$0xff] 0.0
          %285 = vst [vmem:[#allocation2 + $0x20] sm:$0xff] 0.0
          %286 = vst [vmem:[#allocation2 + $0x28] sm:$0xff] 0.0
          %287 = vst [vmem:[#allocation2 + $0x30] sm:$0xff] 0.0
          %288 = vst [vmem:[#allocation2 + $0x38] sm:$0xff] 0.0
        $region44: #{tpu_custom_call.1} parent=39 // pred_fallthru
          _
        %v289 = vld [vmem:[%s274] sm:$0xff]
        %v290 = vld [vmem:[#allocation2] sm:$0xff]
        %v291 = vld [vmem:[#allocation2 + $0x8] sm:$0xff]
        %v292 = vld [vmem:[#allocation2 + $0x10] sm:$0xff]
        %v293 = vld [vmem:[#allocation2 + $0x18] sm:$0xff]
        %v294 = vld [vmem:[#allocation2 + $0x20] sm:$0xff]
        %v295 = vld [vmem:[#allocation2 + $0x28] sm:$0xff]
        %v296 = vld [vmem:[#allocation2 + $0x30] sm:$0xff]
        %v297 = vld [vmem:[#allocation2 + $0x38] sm:$0xff]
        %v298 = vld [vmem:[%s1] sm:$0xff]
        %v299 = vld [vmem:[%s1 + $0x8] sm:$0xff]
        %v300 = vld [vmem:[%s1 + $0x10] sm:$0xff]
        %v301 = vld [vmem:[%s1 + $0x18] sm:$0xff]
        %v302 = vld [vmem:[%s1 + $0x20] sm:$0xff]
        %v303 = vld [vmem:[%s1 + $0x28] sm:$0xff]
        %v304 = vld [vmem:[%s1 + $0x30] sm:$0xff]
        %v305 = vld [vmem:[%s1 + $0x38] sm:$0xff]
        %v306 = vld [vmem:[%s1 + $0x40] sm:$0xff]
        %v307 = vld [vmem:[%s1 + $0x48] sm:$0xff]
        %v308 = vld [vmem:[%s1 + $0x50] sm:$0xff]
        %v309 = vld [vmem:[%s1 + $0x58] sm:$0xff]
        %v310 = vld [vmem:[%s3] sm:$0xff]
        %v311 = vld [vmem:[%s3 + $0x8] sm:$0xff]
        %v312 = vld [vmem:[%s3 + $0x10] sm:$0xff]
        %v313 = vld [vmem:[%s3 + $0x18] sm:$0xff]
        %v314 = vld [vmem:[%s3 + $0x20] sm:$0xff]
        %v315 = vld [vmem:[%s3 + $0x28] sm:$0xff]
        %v316 = vld [vmem:[%s3 + $0x30] sm:$0xff]
        %v317 = vld [vmem:[%s3 + $0x38] sm:$0xff]
        %v318 = vld [vmem:[%s3 + $0x40] sm:$0xff]
        %v319 = vld [vmem:[%s3 + $0x48] sm:$0xff]
        %v320 = vld [vmem:[%s3 + $0x50] sm:$0xff]
        %v321 = vld [vmem:[%s3 + $0x58] sm:$0xff]
        %323 = vset.pattern.permute.xlu0 0
        %324 = vperm.xlu0 %323, %v310
        %v325 = vpop.permute.xlu0 %324
        %328 = vset.pattern.permute.xlu0 0
        %329 = vperm.xlu0 %328, %v311
        %v330 = vpop.permute.xlu0 %329
        %333 = vset.pattern.permute.xlu0 0
        %334 = vperm.xlu0 %333, %v312
        %v335 = vpop.permute.xlu0 %334
        %338 = vset.pattern.permute.xlu0 0
        %339 = vperm.xlu0 %338, %v313
        %v340 = vpop.permute.xlu0 %339
        %343 = vset.pattern.permute.xlu0 0
        %344 = vperm.xlu0 %343, %v314
        %v345 = vpop.permute.xlu0 %344
        %348 = vset.pattern.permute.xlu0 0
        %349 = vperm.xlu0 %348, %v315
        %v350 = vpop.permute.xlu0 %349
        %353 = vset.pattern.permute.xlu0 0
        %354 = vperm.xlu0 %353, %v316
        %v355 = vpop.permute.xlu0 %354
        %358 = vset.pattern.permute.xlu0 0
        %359 = vperm.xlu0 %358, %v317
        %v360 = vpop.permute.xlu0 %359
        %363 = vset.pattern.permute.xlu0 0
        %364 = vperm.xlu0 %363, %v318
        %v365 = vpop.permute.xlu0 %364
        %368 = vset.pattern.permute.xlu0 0
        %369 = vperm.xlu0 %368, %v319
        %v370 = vpop.permute.xlu0 %369
        %373 = vset.pattern.permute.xlu0 0
        %374 = vperm.xlu0 %373, %v320
        %v375 = vpop.permute.xlu0 %374
        %378 = vset.pattern.permute.xlu0 0
        %379 = vperm.xlu0 %378, %v321
        %v380 = vpop.permute.xlu0 %379
        %383 = vst [vmem:[#allocation1] ss:$2 sm:$0xff] %v289
        %v384 = vld.sshfl [vmem:[#allocation1] sm:$0xff pattern:$0x75316420]
        %v385 = vld.sshfl [vmem:[#allocation1 + $0x8] sm:$0xff pattern:$0x75316420]
        %vm386 = vcmask 31744
        %v388 = vsel %vm386, %v298, 0
        %v391 = vsel %vm386, %v299, 0
        %v394 = vsel %vm386, %v300, 0
        %v397 = vsel %vm386, %v301, 0
        %v400 = vsel %vm386, %v302, 0
        %v403 = vsel %vm386, %v303, 0
        %v406 = vsel %vm386, %v304, 0
        %v409 = vsel %vm386, %v305, 0
        %v412 = vsel %vm386, %v306, 0
        %v415 = vsel %vm386, %v307, 0
        %v418 = vsel %vm386, %v308, 0
        %v421 = vsel %vm386, %v309, 0
        %vm423 = vcmask 1043456
        %v424 = vsel %vm423, %v384, 0
        %v426 = vsel %vm423, %v385, 0
        %428 = vmatpush.msra.mxu0 0.0
        %429 = vmatpush.msra.mxu0 0.0
        %430 = vmatpush.msra.mxu0 0.0
        %431 = vmatpush.msra.mxu0 0.0
        %432 = vmatpush.msra.mxu0 0.0
        %433 = vmatpush.msra.mxu0 0.0
        %434 = vmatpush.msra.mxu0 0.0
        %435 = vmatpush.msra.mxu0 0.0
        %436 = vmatpush.msra.mxu0 0.0
        %437 = vmatpush.msra.mxu0 0.0
        %438 = vmatpush.msra.mxu0 0.0
        %439 = vmatpush.msra.mxu0 0.0
        %440 = vmatpush.msra.mxu0 0.0
        %441 = vmatpush.msra.mxu0 0.0
        %442 = vmatpush.msra.mxu0 0.0
        %443 = vmatpush.msra.mxu0 %v424
        %444 = vmatmul.f32.gmra.mxu0 %v388
        %v445 = vpop.f32.mrf.mxu0
        %v446 = vadd.f32 %v325, %v445
        %447 = vmatmul.f32.gmra.mxu0 %v391
        %v448 = vpop.f32.mrf.mxu0
        %v449 = vadd.f32 %v330, %v448
        %450 = vmatmul.f32.gmra.mxu0 %v394
        %v451 = vpop.f32.mrf.mxu0
        %v452 = vadd.f32 %v335, %v451
        %453 = vmatmul.f32.gmra.mxu0 %v397
        %v454 = vpop.f32.mrf.mxu0
        %v455 = vadd.f32 %v340, %v454
        %456 = vmatmul.f32.gmra.mxu0 %v400
        %v457 = vpop.f32.mrf.mxu0
        %v458 = vadd.f32 %v345, %v457
        %459 = vmatmul.f32.gmra.mxu0 %v403
        %v460 = vpop.f32.mrf.mxu0
        %v461 = vadd.f32 %v350, %v460
        %462 = vmatmul.f32.gmra.mxu0 %v406
        %v463 = vpop.f32.mrf.mxu0
        %v464 = vadd.f32 %v355, %v463
        %465 = vmatmul.f32.gmra.mxu0 %v409
        %v466 = vpop.f32.mrf.mxu0
        %v467 = vadd.f32 %v360, %v466
        %468 = vmatmul.f32.gmra.mxu0 %v412
        %v469 = vpop.f32.mrf.mxu0
        %v470 = vadd.f32 %v365, %v469
        %471 = vmatmul.f32.gmra.mxu0 %v415
        %v472 = vpop.f32.mrf.mxu0
        %v473 = vadd.f32 %v370, %v472
        %474 = vmatmul.f32.gmra.mxu0 %v418
        %v475 = vpop.f32.mrf.mxu0
        %v476 = vadd.f32 %v375, %v475
        %477 = vmatmul.f32.gmra.mxu0 %v421
        %v478 = vpop.f32.mrf.mxu0
        %v479 = vadd.f32 %v380, %v478
        %480 = vdwg.mxu0
        %481 = vmatpush.msra.mxu0 0.0
        %482 = vmatpush.msra.mxu0 0.0
        %483 = vmatpush.msra.mxu0 0.0
        %484 = vmatpush.msra.mxu0 0.0
        %485 = vmatpush.msra.mxu0 0.0
        %486 = vmatpush.msra.mxu0 0.0
        %487 = vmatpush.msra.mxu0 0.0
        %488 = vmatpush.msra.mxu0 0.0
        %489 = vmatpush.msra.mxu0 0.0
        %490 = vmatpush.msra.mxu0 0.0
        %491 = vmatpush.msra.mxu0 0.0
        %492 = vmatpush.msra.mxu0 0.0
        %493 = vmatpush.msra.mxu0 0.0
        %494 = vmatpush.msra.mxu0 0.0
        %495 = vmatpush.msra.mxu0 0.0
        %496 = vmatpush.msra.mxu0 %v426
        %497 = vmatmul.f32.gmra.mxu0 %v388
        %v498 = vpop.f32.mrf.mxu0
        %v499 = vadd.f32 %v325, %v498
        %500 = vmatmul.f32.gmra.mxu0 %v391
        %v501 = vpop.f32.mrf.mxu0
        %v502 = vadd.f32 %v330, %v501
        %503 = vmatmul.f32.gmra.mxu0 %v394
        %v504 = vpop.f32.mrf.mxu0
        %v505 = vadd.f32 %v335, %v504
        %506 = vmatmul.f32.gmra.mxu0 %v397
        %v507 = vpop.f32.mrf.mxu0
        %v508 = vadd.f32 %v340, %v507
        %509 = vmatmul.f32.gmra.mxu0 %v400
        %v510 = vpop.f32.mrf.mxu0
        %v511 = vadd.f32 %v345, %v510
        %512 = vmatmul.f32.gmra.mxu0 %v403
        %v513 = vpop.f32.mrf.mxu0
        %v514 = vadd.f32 %v350, %v513
        %515 = vmatmul.f32.gmra.mxu0 %v406
        %v516 = vpop.f32.mrf.mxu0
        %v517 = vadd.f32 %v355, %v516
        %518 = vmatmul.f32.gmra.mxu0 %v409
        %v519 = vpop.f32.mrf.mxu0
        %v520 = vadd.f32 %v360, %v519
        %521 = vmatmul.f32.gmra.mxu0 %v412
        %v522 = vpop.f32.mrf.mxu0
        %v523 = vadd.f32 %v365, %v522
        %524 = vmatmul.f32.gmra.mxu0 %v415
        %v525 = vpop.f32.mrf.mxu0
        %v526 = vadd.f32 %v370, %v525
        %527 = vmatmul.f32.gmra.mxu0 %v418
        %v528 = vpop.f32.mrf.mxu0
        %v529 = vadd.f32 %v375, %v528
        %530 = vmatmul.f32.gmra.mxu0 %v421
        %v531 = vpop.f32.mrf.mxu0
        %v532 = vadd.f32 %v380, %v531
        %533 = vdwg.mxu0
        %v534 = vld [vmem:[%s2] sm:$0xff]
        %v535 = vld [vmem:[%s2 + $0x8] sm:$0xff]
        %v536 = vld [vmem:[%s2 + $0x10] sm:$0xff]
        %v537 = vld [vmem:[%s2 + $0x18] sm:$0xff]
        %v538 = vld [vmem:[%s2 + $0x20] sm:$0xff]
        %v539 = vld [vmem:[%s2 + $0x28] sm:$0xff]
        %v540 = vld [vmem:[%s2 + $0x30] sm:$0xff]
        %v541 = vld [vmem:[%s2 + $0x38] sm:$0xff]
        %v542 = vld [vmem:[%s2 + $0x40] sm:$0xff]
        %v543 = vld [vmem:[%s2 + $0x48] sm:$0xff]
        %v544 = vld [vmem:[%s2 + $0x50] sm:$0xff]
        %v545 = vld [vmem:[%s2 + $0x58] sm:$0xff]
        %v546 = vld [vmem:[%s4] sm:$0xff]
        %v547 = vld [vmem:[%s4 + $0x8] sm:$0xff]
        %v548 = vld [vmem:[%s4 + $0x10] sm:$0xff]
        %v549 = vld [vmem:[%s4 + $0x18] sm:$0xff]
        %v550 = vld [vmem:[%s4 + $0x20] sm:$0xff]
        %v551 = vld [vmem:[%s4 + $0x28] sm:$0xff]
        %v552 = vld [vmem:[%s4 + $0x30] sm:$0xff]
        %v553 = vld [vmem:[%s4 + $0x38] sm:$0xff]
        %v554 = vld [vmem:[%s4 + $0x40] sm:$0xff]
        %v555 = vld [vmem:[%s4 + $0x48] sm:$0xff]
        %v556 = vld [vmem:[%s4 + $0x50] sm:$0xff]
        %v557 = vld [vmem:[%s4 + $0x58] sm:$0xff]
        %559 = vset.pattern.permute.xlu0 0
        %560 = vperm.xlu0 %559, %v546
        %v561 = vpop.permute.xlu0 %560
        %564 = vset.pattern.permute.xlu0 0
        %565 = vperm.xlu0 %564, %v547
        %v566 = vpop.permute.xlu0 %565
        %569 = vset.pattern.permute.xlu0 0
        %570 = vperm.xlu0 %569, %v548
        %v571 = vpop.permute.xlu0 %570
        %574 = vset.pattern.permute.xlu0 0
        %575 = vperm.xlu0 %574, %v549
        %v576 = vpop.permute.xlu0 %575
        %579 = vset.pattern.permute.xlu0 0
        %580 = vperm.xlu0 %579, %v550
        %v581 = vpop.permute.xlu0 %580
        %584 = vset.pattern.permute.xlu0 0
        %585 = vperm.xlu0 %584, %v551
        %v586 = vpop.permute.xlu0 %585
        %589 = vset.pattern.permute.xlu0 0
        %590 = vperm.xlu0 %589, %v552
        %v591 = vpop.permute.xlu0 %590
        %594 = vset.pattern.permute.xlu0 0
        %595 = vperm.xlu0 %594, %v553
        %v596 = vpop.permute.xlu0 %595
        %599 = vset.pattern.permute.xlu0 0
        %600 = vperm.xlu0 %599, %v554
        %v601 = vpop.permute.xlu0 %600
        %604 = vset.pattern.permute.xlu0 0
        %605 = vperm.xlu0 %604, %v555
        %v606 = vpop.permute.xlu0 %605
        %609 = vset.pattern.permute.xlu0 0
        %610 = vperm.xlu0 %609, %v556
        %v611 = vpop.permute.xlu0 %610
        %614 = vset.pattern.permute.xlu0 0
        %615 = vperm.xlu0 %614, %v557
        %v616 = vpop.permute.xlu0 %615
        %vm618 = vcmask 261120
        %v620 = vsel %vm618, %v534, 0
        %v623 = vsel %vm618, %v535, 0
        %v626 = vsel %vm618, %v536, 0
        %v629 = vsel %vm618, %v537, 0
        %v632 = vsel %vm618, %v538, 0
        %v635 = vsel %vm618, %v539, 0
        %v638 = vsel %vm618, %v540, 0
        %v641 = vsel %vm618, %v541, 0
        %v644 = vsel %vm618, %v542, 0
        %v647 = vsel %vm618, %v543, 0
        %v650 = vsel %vm618, %v544, 0
        %v653 = vsel %vm618, %v545, 0
        %655 = vmatpush.msra.mxu0 0.0
        %656 = vmatpush.msra.mxu0 0.0
        %657 = vmatpush.msra.mxu0 0.0
        %658 = vmatpush.msra.mxu0 0.0
        %659 = vmatpush.msra.mxu0 0.0
        %660 = vmatpush.msra.mxu0 0.0
        %661 = vmatpush.msra.mxu0 0.0
        %662 = vmatpush.msra.mxu0 0.0
        %663 = vmatpush.msra.mxu0 0.0
        %664 = vmatpush.msra.mxu0 0.0
        %665 = vmatpush.msra.mxu0 0.0
        %666 = vmatpush.msra.mxu0 0.0
        %667 = vmatpush.msra.mxu0 %v296
        %668 = vmatpush.msra.mxu0 %v294
        %669 = vmatpush.msra.mxu0 %v292
        %670 = vmatpush.msra.mxu0 %v290
        %671 = vmatmul.f32.gmra.mxu0 %v620
        %v672 = vpop.f32.mrf.mxu0
        %v673 = vadd.f32 %v561, %v672
        %674 = vmatmul.f32.gmra.mxu0 %v623
        %v675 = vpop.f32.mrf.mxu0
        %v676 = vadd.f32 %v566, %v675
        %677 = vmatmul.f32.gmra.mxu0 %v626
        %v678 = vpop.f32.mrf.mxu0
        %v679 = vadd.f32 %v571, %v678
        %680 = vmatmul.f32.gmra.mxu0 %v629
        %v681 = vpop.f32.mrf.mxu0
        %v682 = vadd.f32 %v576, %v681
        %683 = vmatmul.f32.gmra.mxu0 %v632
        %v684 = vpop.f32.mrf.mxu0
        %v685 = vadd.f32 %v581, %v684
        %686 = vmatmul.f32.gmra.mxu0 %v635
        %v687 = vpop.f32.mrf.mxu0
        %v688 = vadd.f32 %v586, %v687
        %689 = vmatmul.f32.gmra.mxu0 %v638
        %v690 = vpop.f32.mrf.mxu0
        %v691 = vadd.f32 %v591, %v690
        %692 = vmatmul.f32.gmra.mxu0 %v641
        %v693 = vpop.f32.mrf.mxu0
        %v694 = vadd.f32 %v596, %v693
        %695 = vmatmul.f32.gmra.mxu0 %v644
        %v696 = vpop.f32.mrf.mxu0
        %v697 = vadd.f32 %v601, %v696
        %698 = vmatmul.f32.gmra.mxu0 %v647
        %v699 = vpop.f32.mrf.mxu0
        %v700 = vadd.f32 %v606, %v699
        %701 = vmatmul.f32.gmra.mxu0 %v650
        %v702 = vpop.f32.mrf.mxu0
        %v703 = vadd.f32 %v611, %v702
        %704 = vmatmul.f32.gmra.mxu0 %v653
        %v705 = vpop.f32.mrf.mxu0
        %v706 = vadd.f32 %v616, %v705
        %707 = vdwg.mxu0
        %708 = vmatpush.msra.mxu0 0.0
        %709 = vmatpush.msra.mxu0 0.0
        %710 = vmatpush.msra.mxu0 0.0
        %711 = vmatpush.msra.mxu0 0.0
        %712 = vmatpush.msra.mxu0 0.0
        %713 = vmatpush.msra.mxu0 0.0
        %714 = vmatpush.msra.mxu0 0.0
        %715 = vmatpush.msra.mxu0 0.0
        %716 = vmatpush.msra.mxu0 0.0
        %717 = vmatpush.msra.mxu0 0.0
        %718 = vmatpush.msra.mxu0 0.0
        %719 = vmatpush.msra.mxu0 0.0
        %720 = vmatpush.msra.mxu0 %v297
        %721 = vmatpush.msra.mxu0 %v295
        %722 = vmatpush.msra.mxu0 %v293
        %723 = vmatpush.msra.mxu0 %v291
        %724 = vmatmul.f32.gmra.mxu0 %v620
        %v725 = vpop.f32.mrf.mxu0
        %v726 = vadd.f32 %v561, %v725
        %727 = vmatmul.f32.gmra.mxu0 %v623
        %v728 = vpop.f32.mrf.mxu0
        %v729 = vadd.f32 %v566, %v728
        %730 = vmatmul.f32.gmra.mxu0 %v626
        %v731 = vpop.f32.mrf.mxu0
        %v732 = vadd.f32 %v571, %v731
        %733 = vmatmul.f32.gmra.mxu0 %v629
        %v734 = vpop.f32.mrf.mxu0
        %v735 = vadd.f32 %v576, %v734
        %736 = vmatmul.f32.gmra.mxu0 %v632
        %v737 = vpop.f32.mrf.mxu0
        %v738 = vadd.f32 %v581, %v737
        %739 = vmatmul.f32.gmra.mxu0 %v635
        %v740 = vpop.f32.mrf.mxu0
        %v741 = vadd.f32 %v586, %v740
        %742 = vmatmul.f32.gmra.mxu0 %v638
        %v743 = vpop.f32.mrf.mxu0
        %v744 = vadd.f32 %v591, %v743
        %745 = vmatmul.f32.gmra.mxu0 %v641
        %v746 = vpop.f32.mrf.mxu0
        %v747 = vadd.f32 %v596, %v746
        %748 = vmatmul.f32.gmra.mxu0 %v644
        %v749 = vpop.f32.mrf.mxu0
        %v750 = vadd.f32 %v601, %v749
        %751 = vmatmul.f32.gmra.mxu0 %v647
        %v752 = vpop.f32.mrf.mxu0
        %v753 = vadd.f32 %v606, %v752
        %754 = vmatmul.f32.gmra.mxu0 %v650
        %v755 = vpop.f32.mrf.mxu0
        %v756 = vadd.f32 %v611, %v755
        %757 = vmatmul.f32.gmra.mxu0 %v653
        %v758 = vpop.f32.mrf.mxu0
        %v759 = vadd.f32 %v616, %v758
        %760 = vdwg.mxu0
        %v761 = vadd.f32 %v446, %v673
        %v762 = vadd.f32 %v499, %v726
        %v763 = vadd.f32 %v449, %v676
        %v764 = vadd.f32 %v502, %v729
        %v765 = vadd.f32 %v452, %v679
        %v766 = vadd.f32 %v505, %v732
        %v767 = vadd.f32 %v455, %v682
        %v768 = vadd.f32 %v508, %v735
        %v769 = vsub.f32 0.0, %v761
        %v770 = vsub.f32 0.0, %v762
        %v771 = vsub.f32 0.0, %v763
        %v772 = vsub.f32 0.0, %v764
        %v773 = vsub.f32 0.0, %v765
        %v774 = vsub.f32 0.0, %v766
        %v775 = vsub.f32 0.0, %v767
        %v776 = vsub.f32 0.0, %v768
        %v777 = vmul.f32 %v769, 1.442695
        %v778 = vpow.pop %v777
        %v779 = vmul.f32 %v770, 1.442695
        %v780 = vpow.pop %v779
        %v781 = vmul.f32 %v771, 1.442695
        %v782 = vpow.pop %v781
        %v783 = vmul.f32 %v772, 1.442695
        %v784 = vpow.pop %v783
        %v785 = vmul.f32 %v773, 1.442695
        %v786 = vpow.pop %v785
        %v787 = vmul.f32 %v774, 1.442695
        %v788 = vpow.pop %v787
        %v789 = vmul.f32 %v775, 1.442695
        %v790 = vpow.pop %v789
        %v791 = vmul.f32 %v776, 1.442695
        %v792 = vpow.pop %v791
        %v793 = vadd.f32 %v778, 1.0
        %v794 = vadd.f32 %v780, 1.0
        %v795 = vadd.f32 %v782, 1.0
        %v796 = vadd.f32 %v784, 1.0
        %v797 = vadd.f32 %v786, 1.0
        %v798 = vadd.f32 %v788, 1.0
        %v799 = vadd.f32 %v790, 1.0
        %v800 = vadd.f32 %v792, 1.0
        %v801 = vrcp.pop %v793
        %v802 = vmul.f32 %v793, %v801
        %v803 = vsub.f32 1.0, %v802
        %v804 = vmul.f32 %v801, %v803
        %v805 = vadd.f32 %v801, %v804
        %vm806 = vweird.f32 %v793
        %vm807 = vweird.f32 %v801
        %vm808 = vmor %vm806, %vm807
        %v809 = vsel %vm808, %v801, %v805
        %v810 = vand.u32 2147483647, %v793
        %vm811 = vcmp.eq.f32.partialorder %v810, 8.507059e+37
        %v812 = vand.u32 %v793, 2147483648
        %v813 = vor.u32 1.1754944e-38, %v812
        %v814 = vsel %vm811, %v813, %v809
        %v815 = vmul.f32 1.0, %v814
        %v816 = vrcp.pop %v794
        %v817 = vmul.f32 %v794, %v816
        %v818 = vsub.f32 1.0, %v817
        %v819 = vmul.f32 %v816, %v818
        %v820 = vadd.f32 %v816, %v819
        %vm821 = vweird.f32 %v794
        %vm822 = vweird.f32 %v816
        %vm823 = vmor %vm821, %vm822
        %v824 = vsel %vm823, %v816, %v820
        %v825 = vand.u32 2147483647, %v794
        %vm826 = vcmp.eq.f32.partialorder %v825, 8.507059e+37
        %v827 = vand.u32 %v794, 2147483648
        %v828 = vor.u32 1.1754944e-38, %v827
        %v829 = vsel %vm826, %v828, %v824
        %v830 = vmul.f32 1.0, %v829
        %v831 = vrcp.pop %v795
        %v832 = vmul.f32 %v795, %v831
        %v833 = vsub.f32 1.0, %v832
        %v834 = vmul.f32 %v831, %v833
        %v835 = vadd.f32 %v831, %v834
        %vm836 = vweird.f32 %v795
        %vm837 = vweird.f32 %v831
        %vm838 = vmor %vm836, %vm837
        %v839 = vsel %vm838, %v831, %v835
        %v840 = vand.u32 2147483647, %v795
        %vm841 = vcmp.eq.f32.partialorder %v840, 8.507059e+37
        %v842 = vand.u32 %v795, 2147483648
        %v843 = vor.u32 1.1754944e-38, %v842
        %v844 = vsel %vm841, %v843, %v839
        %v845 = vmul.f32 1.0, %v844
        %v846 = vrcp.pop %v796
        %v847 = vmul.f32 %v796, %v846
        %v848 = vsub.f32 1.0, %v847
        %v849 = vmul.f32 %v846, %v848
        %v850 = vadd.f32 %v846, %v849
        %vm851 = vweird.f32 %v796
        %vm852 = vweird.f32 %v846
        %vm853 = vmor %vm851, %vm852
        %v854 = vsel %vm853, %v846, %v850
        %v855 = vand.u32 2147483647, %v796
        %vm856 = vcmp.eq.f32.partialorder %v855, 8.507059e+37
        %v857 = vand.u32 %v796, 2147483648
        %v858 = vor.u32 1.1754944e-38, %v857
        %v859 = vsel %vm856, %v858, %v854
        %v860 = vmul.f32 1.0, %v859
        %v861 = vrcp.pop %v797
        %v862 = vmul.f32 %v797, %v861
        %v863 = vsub.f32 1.0, %v862
        %v864 = vmul.f32 %v861, %v863
        %v865 = vadd.f32 %v861, %v864
        %vm866 = vweird.f32 %v797
        %vm867 = vweird.f32 %v861
        %vm868 = vmor %vm866, %vm867
        %v869 = vsel %vm868, %v861, %v865
        %v870 = vand.u32 2147483647, %v797
        %vm871 = vcmp.eq.f32.partialorder %v870, 8.507059e+37
        %v872 = vand.u32 %v797, 2147483648
        %v873 = vor.u32 1.1754944e-38, %v872
        %v874 = vsel %vm871, %v873, %v869
        %v875 = vmul.f32 1.0, %v874
        %v876 = vrcp.pop %v798
        %v877 = vmul.f32 %v798, %v876
        %v878 = vsub.f32 1.0, %v877
        %v879 = vmul.f32 %v876, %v878
        %v880 = vadd.f32 %v876, %v879
        %vm881 = vweird.f32 %v798
        %vm882 = vweird.f32 %v876
        %vm883 = vmor %vm881, %vm882
        %v884 = vsel %vm883, %v876, %v880
        %v885 = vand.u32 2147483647, %v798
        %vm886 = vcmp.eq.f32.partialorder %v885, 8.507059e+37
        %v887 = vand.u32 %v798, 2147483648
        %v888 = vor.u32 1.1754944e-38, %v887
        %v889 = vsel %vm886, %v888, %v884
        %v890 = vmul.f32 1.0, %v889
        %v891 = vrcp.pop %v799
        %v892 = vmul.f32 %v799, %v891
        %v893 = vsub.f32 1.0, %v892
        %v894 = vmul.f32 %v891, %v893
        %v895 = vadd.f32 %v891, %v894
        %vm896 = vweird.f32 %v799
        %vm897 = vweird.f32 %v891
        %vm898 = vmor %vm896, %vm897
        %v899 = vsel %vm898, %v891, %v895
        %v900 = vand.u32 2147483647, %v799
        %vm901 = vcmp.eq.f32.partialorder %v900, 8.507059e+37
        %v902 = vand.u32 %v799, 2147483648
        %v903 = vor.u32 1.1754944e-38, %v902
        %v904 = vsel %vm901, %v903, %v899
        %v905 = vmul.f32 1.0, %v904
        %v906 = vrcp.pop %v800
        %v907 = vmul.f32 %v800, %v906
        %v908 = vsub.f32 1.0, %v907
        %v909 = vmul.f32 %v906, %v908
        %v910 = vadd.f32 %v906, %v909
        %vm911 = vweird.f32 %v800
        %vm912 = vweird.f32 %v906
        %vm913 = vmor %vm911, %vm912
        %v914 = vsel %vm913, %v906, %v910
        %v915 = vand.u32 2147483647, %v800
        %vm916 = vcmp.eq.f32.partialorder %v915, 8.507059e+37
        %v917 = vand.u32 %v800, 2147483648
        %v918 = vor.u32 1.1754944e-38, %v917
        %v919 = vsel %vm916, %v918, %v914
        %v920 = vmul.f32 1.0, %v919
        %v921 = vadd.f32 %v458, %v685
        %v922 = vadd.f32 %v511, %v738
        %v923 = vadd.f32 %v461, %v688
        %v924 = vadd.f32 %v514, %v741
        %v925 = vadd.f32 %v464, %v691
        %v926 = vadd.f32 %v517, %v744
        %v927 = vadd.f32 %v467, %v694
        %v928 = vadd.f32 %v520, %v747
        %v929 = vsub.f32 0.0, %v921
        %v930 = vsub.f32 0.0, %v922
        %v931 = vsub.f32 0.0, %v923
        %v932 = vsub.f32 0.0, %v924
        %v933 = vsub.f32 0.0, %v925
        %v934 = vsub.f32 0.0, %v926
        %v935 = vsub.f32 0.0, %v927
        %v936 = vsub.f32 0.0, %v928
        %v937 = vmul.f32 %v929, 1.442695
        %v938 = vpow.pop %v937
        %v939 = vmul.f32 %v930, 1.442695
        %v940 = vpow.pop %v939
        %v941 = vmul.f32 %v931, 1.442695
        %v942 = vpow.pop %v941
        %v943 = vmul.f32 %v932, 1.442695
        %v944 = vpow.pop %v943
        %v945 = vmul.f32 %v933, 1.442695
        %v946 = vpow.pop %v945
        %v947 = vmul.f32 %v934, 1.442695
        %v948 = vpow.pop %v947
        %v949 = vmul.f32 %v935, 1.442695
        %v950 = vpow.pop %v949
        %v951 = vmul.f32 %v936, 1.442695
        %v952 = vpow.pop %v951
        %v953 = vadd.f32 %v938, 1.0
        %v954 = vadd.f32 %v940, 1.0
        %v955 = vadd.f32 %v942, 1.0
        %v956 = vadd.f32 %v944, 1.0
        %v957 = vadd.f32 %v946, 1.0
        %v958 = vadd.f32 %v948, 1.0
        %v959 = vadd.f32 %v950, 1.0
        %v960 = vadd.f32 %v952, 1.0
        %v961 = vrcp.pop %v953
        %v962 = vmul.f32 %v953, %v961
        %v963 = vsub.f32 1.0, %v962
        %v964 = vmul.f32 %v961, %v963
        %v965 = vadd.f32 %v961, %v964
        %vm966 = vweird.f32 %v953
        %vm967 = vweird.f32 %v961
        %vm968 = vmor %vm966, %vm967
        %v969 = vsel %vm968, %v961, %v965
        %v970 = vand.u32 2147483647, %v953
        %vm971 = vcmp.eq.f32.partialorder %v970, 8.507059e+37
        %v972 = vand.u32 %v953, 2147483648
        %v973 = vor.u32 1.1754944e-38, %v972
        %v974 = vsel %vm971, %v973, %v969
        %v975 = vmul.f32 1.0, %v974
        %v976 = vrcp.pop %v954
        %v977 = vmul.f32 %v954, %v976
        %v978 = vsub.f32 1.0, %v977
        %v979 = vmul.f32 %v976, %v978
        %v980 = vadd.f32 %v976, %v979
        %vm981 = vweird.f32 %v954
        %vm982 = vweird.f32 %v976
        %vm983 = vmor %vm981, %vm982
        %v984 = vsel %vm983, %v976, %v980
        %v985 = vand.u32 2147483647, %v954
        %vm986 = vcmp.eq.f32.partialorder %v985, 8.507059e+37
        %v987 = vand.u32 %v954, 2147483648
        %v988 = vor.u32 1.1754944e-38, %v987
        %v989 = vsel %vm986, %v988, %v984
        %v990 = vmul.f32 1.0, %v989
        %v991 = vrcp.pop %v955
        %v992 = vmul.f32 %v955, %v991
        %v993 = vsub.f32 1.0, %v992
        %v994 = vmul.f32 %v991, %v993
        %v995 = vadd.f32 %v991, %v994
        %vm996 = vweird.f32 %v955
        %vm997 = vweird.f32 %v991
        %vm998 = vmor %vm996, %vm997
        %v999 = vsel %vm998, %v991, %v995
        %v1000 = vand.u32 2147483647, %v955
        %vm1001 = vcmp.eq.f32.partialorder %v1000, 8.507059e+37
        %v1002 = vand.u32 %v955, 2147483648
        %v1003 = vor.u32 1.1754944e-38, %v1002
        %v1004 = vsel %vm1001, %v1003, %v999
        %v1005 = vmul.f32 1.0, %v1004
        %v1006 = vrcp.pop %v956
        %v1007 = vmul.f32 %v956, %v1006
        %v1008 = vsub.f32 1.0, %v1007
        %v1009 = vmul.f32 %v1006, %v1008
        %v1010 = vadd.f32 %v1006, %v1009
        %vm1011 = vweird.f32 %v956
        %vm1012 = vweird.f32 %v1006
        %vm1013 = vmor %vm1011, %vm1012
        %v1014 = vsel %vm1013, %v1006, %v1010
        %v1015 = vand.u32 2147483647, %v956
        %vm1016 = vcmp.eq.f32.partialorder %v1015, 8.507059e+37
        %v1017 = vand.u32 %v956, 2147483648
        %v1018 = vor.u32 1.1754944e-38, %v1017
        %v1019 = vsel %vm1016, %v1018, %v1014
        %v1020 = vmul.f32 1.0, %v1019
        %v1021 = vrcp.pop %v957
        %v1022 = vmul.f32 %v957, %v1021
        %v1023 = vsub.f32 1.0, %v1022
        %v1024 = vmul.f32 %v1021, %v1023
        %v1025 = vadd.f32 %v1021, %v1024
        %vm1026 = vweird.f32 %v957
        %vm1027 = vweird.f32 %v1021
        %vm1028 = vmor %vm1026, %vm1027
        %v1029 = vsel %vm1028, %v1021, %v1025
        %v1030 = vand.u32 2147483647, %v957
        %vm1031 = vcmp.eq.f32.partialorder %v1030, 8.507059e+37
        %v1032 = vand.u32 %v957, 2147483648
        %v1033 = vor.u32 1.1754944e-38, %v1032
        %v1034 = vsel %vm1031, %v1033, %v1029
        %v1035 = vmul.f32 1.0, %v1034
        %v1036 = vrcp.pop %v958
        %v1037 = vmul.f32 %v958, %v1036
        %v1038 = vsub.f32 1.0, %v1037
        %v1039 = vmul.f32 %v1036, %v1038
        %v1040 = vadd.f32 %v1036, %v1039
        %vm1041 = vweird.f32 %v958
        %vm1042 = vweird.f32 %v1036
        %vm1043 = vmor %vm1041, %vm1042
        %v1044 = vsel %vm1043, %v1036, %v1040
        %v1045 = vand.u32 2147483647, %v958
        %vm1046 = vcmp.eq.f32.partialorder %v1045, 8.507059e+37
        %v1047 = vand.u32 %v958, 2147483648
        %v1048 = vor.u32 1.1754944e-38, %v1047
        %v1049 = vsel %vm1046, %v1048, %v1044
        %v1050 = vmul.f32 1.0, %v1049
        %v1051 = vrcp.pop %v959
        %v1052 = vmul.f32 %v959, %v1051
        %v1053 = vsub.f32 1.0, %v1052
        %v1054 = vmul.f32 %v1051, %v1053
        %v1055 = vadd.f32 %v1051, %v1054
        %vm1056 = vweird.f32 %v959
        %vm1057 = vweird.f32 %v1051
        %vm1058 = vmor %vm1056, %vm1057
        %v1059 = vsel %vm1058, %v1051, %v1055
        %v1060 = vand.u32 2147483647, %v959
        %vm1061 = vcmp.eq.f32.partialorder %v1060, 8.507059e+37
        %v1062 = vand.u32 %v959, 2147483648
        %v1063 = vor.u32 1.1754944e-38, %v1062
        %v1064 = vsel %vm1061, %v1063, %v1059
        %v1065 = vmul.f32 1.0, %v1064
        %v1066 = vrcp.pop %v960
        %v1067 = vmul.f32 %v960, %v1066
        %v1068 = vsub.f32 1.0, %v1067
        %v1069 = vmul.f32 %v1066, %v1068
        %v1070 = vadd.f32 %v1066, %v1069
        %vm1071 = vweird.f32 %v960
        %vm1072 = vweird.f32 %v1066
        %vm1073 = vmor %vm1071, %vm1072
        %v1074 = vsel %vm1073, %v1066, %v1070
        %v1075 = vand.u32 2147483647, %v960
        %vm1076 = vcmp.eq.f32.partialorder %v1075, 8.507059e+37
        %v1077 = vand.u32 %v960, 2147483648
        %v1078 = vor.u32 1.1754944e-38, %v1077
        %v1079 = vsel %vm1076, %v1078, %v1074
        %v1080 = vmul.f32 1.0, %v1079
        %v1081 = vmul.f32 %v975, %v697
        %v1082 = vmul.f32 %v990, %v750
        %v1083 = vmul.f32 %v1005, %v700
        %v1084 = vmul.f32 %v1020, %v753
        %v1085 = vmul.f32 %v1035, %v703
        %v1086 = vmul.f32 %v1050, %v756
        %v1087 = vmul.f32 %v1065, %v706
        %v1088 = vmul.f32 %v1080, %v759
        %v1089 = vadd.f32 %v470, %v1081
        %v1090 = vadd.f32 %v523, %v1082
        %v1091 = vadd.f32 %v473, %v1083
        %v1092 = vadd.f32 %v526, %v1084
        %v1093 = vadd.f32 %v476, %v1085
        %v1094 = vadd.f32 %v529, %v1086
        %v1095 = vadd.f32 %v479, %v1087
        %v1096 = vadd.f32 %v532, %v1088
        %v1097 = vmax.f32 %v1089, 0.0
        %v1098 = vmax.f32 %v1090, 0.0
        %v1099 = vmax.f32 %v1091, 0.0
        %v1100 = vmax.f32 %v1092, 0.0
        %v1101 = vmax.f32 %v1093, 0.0
        %v1102 = vmax.f32 %v1094, 0.0
        %v1103 = vmax.f32 %v1095, 0.0
        %v1104 = vmax.f32 %v1096, 0.0
        %v1105 = vmul.f32 %v815, %v290
        %v1106 = vmul.f32 %v830, %v291
        %v1107 = vmul.f32 %v845, %v292
        %v1108 = vmul.f32 %v860, %v293
        %v1109 = vmul.f32 %v875, %v294
        %v1110 = vmul.f32 %v890, %v295
        %v1111 = vmul.f32 %v905, %v296
        %v1112 = vmul.f32 %v920, %v297
        %v1113 = vsub.f32 1.0, %v815
        %v1114 = vsub.f32 1.0, %v830
        %v1115 = vsub.f32 1.0, %v845
        %v1116 = vsub.f32 1.0, %v860
        %v1117 = vsub.f32 1.0, %v875
        %v1118 = vsub.f32 1.0, %v890
        %v1119 = vsub.f32 1.0, %v905
        %v1120 = vsub.f32 1.0, %v920
        %v1121 = vmul.f32 %v1113, %v1097
        %v1122 = vmul.f32 %v1114, %v1098
        %v1123 = vmul.f32 %v1115, %v1099
        %v1124 = vmul.f32 %v1116, %v1100
        %v1125 = vmul.f32 %v1117, %v1101
        %v1126 = vmul.f32 %v1118, %v1102
        %v1127 = vmul.f32 %v1119, %v1103
        %v1128 = vmul.f32 %v1120, %v1104
        %v1129 = vadd.f32 %v1105, %v1121
        %v1130 = vadd.f32 %v1106, %v1122
        %v1131 = vadd.f32 %v1107, %v1123
        %v1132 = vadd.f32 %v1108, %v1124
        %v1133 = vadd.f32 %v1109, %v1125
        %v1134 = vadd.f32 %v1110, %v1126
        %v1135 = vadd.f32 %v1111, %v1127
        %v1136 = vadd.f32 %v1112, %v1128
        %1137 = vst [vmem:[#allocation2] sm:$0xff] %v1129
        %1138 = vst [vmem:[#allocation2 + $0x8] sm:$0xff] %v1130
        %1139 = vst [vmem:[#allocation2 + $0x10] sm:$0xff] %v1131
        %1140 = vst [vmem:[#allocation2 + $0x18] sm:$0xff] %v1132
        %1141 = vst [vmem:[#allocation2 + $0x20] sm:$0xff] %v1133
        %1142 = vst [vmem:[#allocation2 + $0x28] sm:$0xff] %v1134
        %1143 = vst [vmem:[#allocation2 + $0x30] sm:$0xff] %v1135
        %1144 = vst [vmem:[#allocation2 + $0x38] sm:$0xff] %v1136
        %1145 = vst [vmem:[%s261] sm:$0xff] %v1129
        %1146 = vst [vmem:[%s261 + $0x8] sm:$0xff] %v1130
        %1147 = vst [vmem:[%s261 + $0x10] sm:$0xff] %v1131
        %1148 = vst [vmem:[%s261 + $0x18] sm:$0xff] %v1132
        %1149 = vst [vmem:[%s261 + $0x20] sm:$0xff] %v1133
        %1150 = vst [vmem:[%s261 + $0x28] sm:$0xff] %v1134
        %1151 = vst [vmem:[%s261 + $0x30] sm:$0xff] %v1135
        %1152 = vst [vmem:[%s261 + $0x38] sm:$0xff] %v1136
        %s1153 = sand.u32 %s164, 1
        %s1154 = scalar_lea.sflag [#allocation4], %s1153
        %s1155 = sand.u32 %s164, 1
        %s1156 = smul.addr %s1155, 64
        %s1157 = scalar_lea.vmem [#allocation3], %s1156
        // Predicated region
        $region45: #{tpu_custom_call.1} parent=39 // pred_check
          %p1158 = pneg %p174
        $region46: #{tpu_custom_call.1} parent=39 // pred_check_branch
          %1160 = sbr.rel (%p1158) target = $region48
        $region47: #{tpu_custom_call.1} parent=39 // pred_region
          %s1161 = smul.u32 2, %s25
          %1163 = vsyncadd %s1154, 0
          %s1164 = smul.addr %s24, 8
          %s1165 = sadd.s32 %s1161, %s1164
          %s1166 = smul.addr %s26, 16
          %s1167 = sadd.s32 %s1165, %s1166
          %s1168 = smul.addr %s1167, 8
          %s1169 = scalar_lea.hbm %s5, %s1168
          %s1170 = sshll.u32 %s1157, 4
          %s1171 = int_to_ptr.vmem [resolvable:$true] %s1170
          %s1172 = sshll.u32 %s1169, 4
          %s1173 = int_to_ptr.hbm [resolvable:$true] %s1172
          %1178 = dma.vmem_to_hbm [thread:$0]  %s1171, 1024, %s1173, %s1154, 256, 256, 16
        $region48: #{tpu_custom_call.1} parent=39 // pred_fallthru
          _
      $region40: #{tpu_custom_call.1} parent=5 // pred_fallthru
        _
      %p1179 = scmp.le.s32.totalorder 2, %s14
      // Predicated region
      $region49: #{tpu_custom_call.1} parent=5 // pred_check
        %p1180 = pneg %p1179
      $region50: #{tpu_custom_call.1} parent=5 // pred_check_branch
        %1182 = sbr.rel (%p1180) target = $region52
      $region51: #{tpu_custom_call.1} parent=5 // pred_region
        %s1183 = ssub.s32 %s14, 2
        // Predicated region
        $region53: #{tpu_custom_call.1} parent=51 // pred_check
          %p1184 = pneg %p180
        $region54: #{tpu_custom_call.1} parent=51 // pred_check_branch
          %1186 = sbr.rel (%p1184) target = $region56
        $region55: #{tpu_custom_call.1} parent=51 // pred_region
          %s1187 = sand.u32 %s165, 1
          %s1188 = scalar_lea.sflag [#allocation4], %s1187
          %s1189 = sand.u32 %s165, 1
          %s1190 = smul.addr %s1189, 64
          %s1191 = scalar_lea.vmem [#allocation3], %s1190
          %1193 = dma.done %s1188, 1024
        $region56: #{tpu_custom_call.1} parent=51 // pred_fallthru
          _
      $region52: #{tpu_custom_call.1} parent=5 // pred_fallthru
        _
    $region6: #{tpu_custom_call.1} parent=1 // loop_footer
      %s18 = sadd.s32 1, %s14
    $region7: #{tpu_custom_call.1} parent=1 // loop_footer_branch
      %13 = sbr.rel target = $region3
    $region8: #{tpu_custom_call.1} parent=1 // loop_exit
      _
    %1194 = vsyncpa [#allocation4], 1
    %s1195 = scalar_lea.sflag [#allocation4], 1
    %1196 = vsyncpa %s1195, 1

</llo_original>
